<compile_context>
chip_gen: v6e
topology: v6e:2x2x1
jax: 0.10.0
libtpu: 0.0.40
codegen_flags: <defaults>
</compile_context>

<pallas_src>
import functools

import jax
import jax.numpy as jnp
from jax.experimental import pallas as pl
from jax.experimental.pallas import tpu as pltpu

_LANE = 128
_SUBLANE = 8
_FUSE_M_MAX = 256          # below this, the lm_head sweep is weight-stream bound
_TV_CANDIDATES = (4096, 2048, 1024, 512, 256, 128)
_TM_CANDIDATES = (512, 256, 128, 64, 32, 16, 8)


def _round_up(x, m):
    return ((x + m - 1) // m) * m


def _vmem_budget_bytes():
    """Usable VMEM budget per TensorCore (headroom left for compiler scratch)."""
    cap = 128 * 1024 * 1024          # v5e / v6e physical VMEM
    try:
        info = pltpu.get_tpu_info()
        cap = int(getattr(info, "vmem_capacity_bytes", cap)) or cap
    except Exception:
        pass
    # 75% of physical (v7x: 48 MiB of 64; v5e/v6e capped at 100 MiB).
    return min((cap * 3) // 4, 100 * 1024 * 1024)


def _vmem_limit(footprint, budget):
    return max(32 * 1024 * 1024, min(budget, footprint + 8 * 1024 * 1024))


def _choose_full_act_tile_v(M, H, V, act_itemsize, budget):
    """Largest tile_v for the activation-resident variants that fits VMEM."""
    act_bytes = 2 * M * H * act_itemsize          # conservative (double-buffered)
    for tv in _TV_CANDIDATES:
        tv_eff = min(tv, _round_up(V, _LANE))
        fp = act_bytes + 2 * (H * tv_eff * 2 + M * tv_eff * 4)
        if fp <= budget:
            return tv_eff, fp
    return None, None


def _choose_weight_resident_tiles(M, H, V, budget):
    """Largest (tile_m, tile_v) for the weight-resident loop order."""
    for tv in _TV_CANDIDATES:
        tv_eff = min(tv, _round_up(V, _LANE))
        for tm in _TM_CANDIDATES:
            tm_eff = min(tm, _round_up(M, _SUBLANE))
            fp = 2 * (tm_eff * H * 2 + H * tv_eff * 2 + tm_eff * tv_eff * 4)
            if fp <= budget:
                return tm_eff, tv_eff, fp
    # Last resort: smallest tiles (any realistic H fits well before this).
    tm_eff = min(_TM_CANDIDATES[-1], _round_up(M, _SUBLANE))
    tv_eff = min(_TV_CANDIDATES[-1], _round_up(V, _LANE))
    fp = 2 * (tm_eff * H * 2 + H * tv_eff * 2 + tm_eff * tv_eff * 4)
    return tm_eff, tv_eff, fp


# -----------------------------------------------------------------------------
# Kernels
# -----------------------------------------------------------------------------
def _rmsnorm_kernel(x_ref, o_ref, *, eps):
    # x_ref: (tm, H) activations tile ; o_ref: (tm, H) bf16 normalized tile.
    x = x_ref[...].astype(jnp.float32)
    inv_rms = jax.lax.rsqrt(jnp.mean(x * x, axis=-1, keepdims=True) + eps)
    o_ref[...] = (x * inv_rms).astype(o_ref.dtype)


def _lmhead_matmul_kernel(xn_ref, w_ref, o_ref):
    # xn_ref: (tm, H) bf16 ; w_ref: (H, tv) bf16 folded weight ; o_ref: (tm, tv) f32.
    o_ref[...] = jnp.dot(xn_ref[...], w_ref[...],
                         preferred_element_type=jnp.float32)


def _fused_norm_matmul_kernel(x_ref, w_ref, o_ref, *, eps):
    # x_ref: (M, H) resident activations (original dtype); w_ref: (H, tv) bf16.
    # The norm is recomputed per V-tile: for M <= 256 it is a few K VPU/XLU ops
    # hidden under the H x tv weight DMA, and it keeps the kernel stateless
    # across grid steps (safe under v7x megacore sharding of the V axis).
    x = x_ref[...].astype(jnp.float32)
    inv_rms = jax.lax.rsqrt(jnp.mean(x * x, axis=-1, keepdims=True) + eps)
    xn = (x * inv_rms).astype(jnp.bfloat16)
    o_ref[...] = jnp.dot(xn, w_ref[...], preferred_element_type=jnp.float32)


# -----------------------------------------------------------------------------
# pallas_call wrappers
# -----------------------------------------------------------------------------
def rmsnorm_bf16(x2d, *, eps):
    """x2d: (M, H) -> (M, H) bf16, x * rsqrt(mean(x^2) + eps)."""
    M, H = x2d.shape
    tile_m = min(256, _round_up(M, _SUBLANE))
    vmem = max(32 * 1024 * 1024,
               2 * tile_m * H * (x2d.dtype.itemsize + 2) + 4 * 1024 * 1024)
    return pl.pallas_call(
        functools.partial(_rmsnorm_kernel, eps=eps),
        out_shape=jax.ShapeDtypeStruct((M, H), jnp.bfloat16),
        grid_spec=pltpu.PrefetchScalarGridSpec(
            num_scalar_prefetch=0,
            grid=(pl.cdiv(M, tile_m),),
            in_specs=[pl.BlockSpec((tile_m, H), lambda i: (i, 0))],
            out_specs=pl.BlockSpec((tile_m, H), lambda i: (i, 0)),
        ),
        compiler_params=pltpu.CompilerParams(
            dimension_semantics=("parallel",),
            vmem_limit_bytes=vmem),
    )(x2d)


def _fused_rmsnorm_lmhead(x2d, w_t, *, eps, tile_v, vmem_bytes):
    M, H = x2d.shape
    V = w_t.shape[1]
    num_v = pl.cdiv(V, tile_v)
    cost = pl.CostEstimate(
        flops=2 * M * H * V + 4 * M * H * num_v,
        transcendentals=M * num_v,
        bytes_accessed=M * H * x2d.dtype.itemsize + H * V * 2 + M * V * 4)
    return pl.pallas_call(
        functools.partial(_fused_norm_matmul_kernel, eps=eps),
        out_shape=jax.ShapeDtypeStruct((M, V), jnp.float32),
        grid_spec=pltpu.PrefetchScalarGridSpec(
            num_scalar_prefetch=0,
            grid=(num_v,),
            in_specs=[
                pl.BlockSpec((M, H), lambda j: (0, 0)),        # resident acts
                pl.BlockSpec((H, tile_v), lambda j: (0, j)),   # streamed weight
            ],
            out_specs=pl.BlockSpec((M, tile_v), lambda j: (0, j)),
        ),
        compiler_params=pltpu.CompilerParams(
            dimension_semantics=("parallel",),
            vmem_limit_bytes=vmem_bytes),
        cost_estimate=cost,
    )(x2d, w_t)


def _lmhead_matmul_resident(xn, w_t, *, tile_v, vmem_bytes):
    """Activations (bf16) resident in VMEM; weight streamed exactly once."""
    M, H = xn.shape
    V = w_t.shape[1]
    cost = pl.CostEstimate(
        flops=2 * M * H * V, transcendentals=0,
        bytes_accessed=M * H * 2 + H * V * 2 + M * V * 4)
    return pl.pallas_call(
        _lmhead_matmul_kernel,
        out_shape=jax.ShapeDtypeStruct((M, V), jnp.float32),
        grid_spec=pltpu.PrefetchScalarGridSpec(
            num_scalar_prefetch=0,
            grid=(pl.cdiv(V, tile_v),),
            in_specs=[
                pl.BlockSpec((M, H), lambda j: (0, 0)),
                pl.BlockSpec((H, tile_v), lambda j: (0, j)),
            ],
            out_specs=pl.BlockSpec((M, tile_v), lambda j: (0, j)),
        ),
        compiler_params=pltpu.CompilerParams(
            dimension_semantics=("parallel",),
            vmem_limit_bytes=vmem_bytes),
        cost_estimate=cost,
    )(xn, w_t)


def _lmhead_matmul_weight_resident(xn, w_t, *, tile_m, tile_v, vmem_bytes):
    """Grid (V_tiles, M_tiles) with M fast: the big weight tile stays resident
    across the M sweep; activations (small) are re-streamed per V tile."""
    M, H = xn.shape
    V = w_t.shape[1]
    num_v = pl.cdiv(V, tile_v)
    num_m = pl.cdiv(M, tile_m)
    cost = pl.CostEstimate(
        flops=2 * M * H * V, transcendentals=0,
        bytes_accessed=num_v * M * H * 2 + H * V * 2 + M * V * 4)
    return pl.pallas_call(
        _lmhead_matmul_kernel,
        out_shape=jax.ShapeDtypeStruct((M, V), jnp.float32),
        grid_spec=pltpu.PrefetchScalarGridSpec(
            num_scalar_prefetch=0,
            grid=(num_v, num_m),
            in_specs=[
                pl.BlockSpec((tile_m, H), lambda j, i: (i, 0)),   # activations
                pl.BlockSpec((H, tile_v), lambda j, i: (0, j)),   # folded weight
            ],
            out_specs=pl.BlockSpec((tile_m, tile_v), lambda j, i: (i, j)),
        ),
        compiler_params=pltpu.CompilerParams(
            dimension_semantics=("parallel", "parallel"),
            vmem_limit_bytes=vmem_bytes),
        cost_estimate=cost,
    )(xn, w_t)


def lmhead_logits(x2d, w_t, *, eps, variant=None):
    """RMSNorm(x) @ folded_weight -> f32 logits, auto-picking the kernel variant."""
    M, H = x2d.shape
    Hw, V = w_t.shape
    assert H == Hw
    budget = _vmem_budget_bytes()

    if variant is None:
        if M <= _FUSE_M_MAX:
            tv, _ = _choose_full_act_tile_v(M, H, V, x2d.dtype.itemsize, budget)
            if tv is not None:
                variant = "fused"
        if variant is None:
            tv, _ = _choose_full_act_tile_v(M, H, V, 2, budget)
            variant = "resident" if tv is not None else "weight_resident"

    if variant == "fused":
        tv, fp = _choose_full_act_tile_v(M, H, V, x2d.dtype.itemsize, budget)
        if tv is None:
            raise ValueError("activations too large for the fused variant")
        return _fused_rmsnorm_lmhead(x2d, w_t, eps=eps, tile_v=tv,
                                     vmem_bytes=_vmem_limit(fp, budget))

    xn = rmsnorm_bf16(x2d, eps=eps)
    if variant == "resident":
        tv, fp = _choose_full_act_tile_v(M, H, V, 2, budget)
        if tv is None:
            raise ValueError("activations too large for the resident variant")
        return _lmhead_matmul_resident(xn, w_t, tile_v=tv,
                                       vmem_bytes=_vmem_limit(fp, budget))
    if variant == "weight_resident":
        tm, tv, fp = _choose_weight_resident_tiles(M, H, V, budget)
        return _lmhead_matmul_weight_resident(xn, w_t, tile_m=tm, tile_v=tv,
                                              vmem_bytes=_vmem_limit(fp, budget))
    raise ValueError(f"unknown variant {variant!r}")


# -----------------------------------------------------------------------------
# CausalLM forward (glue in plain JAX, hot path in the Pallas kernels above)
# -----------------------------------------------------------------------------
def decoder_forward(attn_mask, pos_ids, input_embeds, kv_cache):
    # TODO(synk): `Decoder(config)` internals are not provided in the source
    # module; treated here as an identity passthrough on input_embeds.
    del attn_mask, pos_ids, kv_cache
    return input_embeds


def causal_lm_forward(infer_params, attn_mask, pos_ids, input_embeds, kv_cache,
                      *, eps, variant=None):
    x = decoder_forward(attn_mask, pos_ids, input_embeds, kv_cache)  # (B, S, H)
    B, S, H = x.shape
    w_t = infer_params["lm_head_w_t_folded"]                         # (H, V) bf16
    V = w_t.shape[1]

    x2d = x.reshape(B * S, H)
    logits2d = lmhead_logits(x2d, w_t, eps=eps, variant=variant)     # (M, V) f32
    logits = logits2d.reshape(B, S, V)

    return_data = {"logits": logits}
    if kv_cache is not None:
        return_data["kv_cache"] = kv_cache
    return return_data


# -----------------------------------------------------------------------------
# Deterministic parameter init + inference-time weight preparation
# -----------------------------------------------------------------------------
def init_params(key, hidden_size, vocab_size):
    k_lm, k_g = jax.random.split(key)
    # nn.Linear(hidden, vocab, bias=False).weight is (V, H).
    lm_head_w = jax.random.normal(k_lm, (vocab_size, hidden_size),
                                  dtype=jnp.float32) * 0.02
    # Module inits rmsNorm to zeros; use a small nonzero gamma here so the
    # (1 + gamma) fold is actually exercised by the numerical check.
    rms_gamma = 0.1 * jax.random.normal(k_g, (hidden_size,), dtype=jnp.float32)
    return {"lm_head_w": lm_head_w, "rms_gamma": rms_gamma}


def prepare_inference_params(params):
    """Fold (1 + gamma) into the transposed lm_head weight (f32), cast to bf16.

    rmsnorm(x) * (1+g) @ W^T  ==  (x * inv_rms) @ (diag(1+g) @ W^T)  exactly,
    so the fold is done in f32 BEFORE the bf16 cast (single rounding).
    """
    # TODO(synk): optionally pre-block the folded weight as (V_tiles, H, tile_v)
    # contiguous tiles and/or quantize per-generation (int8 on v5e/v6e, fp8 on
    # v7x) to further halve the weight HBM stream.
    w_t = params["lm_head_w"].T.astype(jnp.float32)                    # (H, V)
    scale = (1.0 + params["rms_gamma"].astype(jnp.float32))[:, None]   # (H, 1)
    return {"lm_head_w_t_folded": (scale * w_t).astype(jnp.bfloat16)}


# -----------------------------------------------------------------------------
# Demo / correctness check
# -----------------------------------------------------------------------------
if __name__ == "__main__":
    # Small config consistent with the module's forward.
    B, S, H, V = 2, 8, 32, 256
    EPS = 1e-6

    key = jax.random.PRNGKey(0)
    k_params, k_x = jax.random.split(key)

    params = init_params(k_params, H, V)
    infer_params = prepare_inference_params(params)

    input_embeds = jax.random.normal(k_x, (B, S, H), dtype=jnp.float32)
    attn_mask = jnp.ones((B, 1, S, S), dtype=jnp.float32)
    pos_ids = jnp.broadcast_to(jnp.arange(S, dtype=jnp.int32)[None, :], (B, S))
    kv_cache = None

    # (1) bf16-consistent reference (same rounding points as the kernels:
    #     bf16 x_norm, bf16 folded weight, f32 accumulate).
    x = input_embeds.astype(jnp.float32)
    inv_rms = jax.lax.rsqrt(jnp.mean(x * x, axis=-1, keepdims=True) + EPS)
    xn_bf16 = (x * inv_rms).astype(jnp.bfloat16)
    w_folded_f32 = infer_params["lm_head_w_t_folded"].astype(jnp.float32)
    ref_exact = jnp.einsum("bsh,hv->bsv", xn_bf16.astype(jnp.float32),
                           w_folded_f32, precision=jax.lax.Precision.HIGHEST)
    # (2) Loose reference against the original f32 PyTorch formula
    #     x * rsqrt(mean(x^2)+eps) * (1+gamma) @ W^T  (bf16 rounding slack).
    xn_f32 = x * inv_rms * (1.0 + params["rms_gamma"])
    ref_f32 = jnp.einsum("bsh,hv->bsv", xn_f32,
                         params["lm_head_w"].T.astype(jnp.float32),
                         precision=jax.lax.Precision.HIGHEST)

    # Exercise every kernel variant plus the auto-dispatch path (which picks
    # the fused decode kernel for these shapes).
    for variant in ("fused", "resident", "weight_resident", None):
        out = causal_lm_forward(infer_params, attn_mask, pos_ids, input_embeds,
                                kv_cache, eps=EPS, variant=variant)
        logits = jax.block_until_ready(out["logits"])
        assert logits.shape == (B, S, V) and logits.dtype == jnp.float32, variant
        assert jnp.allclose(logits, ref_exact, atol=2e-4, rtol=2e-4), variant
        assert jnp.allclose(logits, ref_f32, atol=1e-2, rtol=5e-2), variant

    print("KERNEL_OK")
</pallas_src>

<mosaic_0001>
module attributes {stable_mosaic.version = 11 : i64} {
  func.func @_fused_norm_matmul_kernel(%arg0: i32, %arg1: memref<16x32xf32, #tpu.memory_space<vmem>>, %arg2: memref<32x256xbf16, #tpu.memory_space<vmem>>, %arg3: memref<16x256xf32, #tpu.memory_space<vmem>>) attributes {dimension_semantics = [#tpu.dimension_semantics<parallel>], iteration_bounds = array<i64: 1>, scalar_prefetch = 0 : i64, scratch_operands = 0 : i64, tpu.core_type = #tpu.core_type<tc>, window_params = [{pipeline_mode = #tpu.pipeline_mode<synchronous>, transform_indices = @transform_0, window_bounds = array<i64: 16, 32>}, {transform_indices = @transform_1, window_bounds = array<i64: 32, 256>}, {transform_indices = @transform_2, window_bounds = array<i64: 16, 256>}]} {
    %c0 = arith.constant 0 : index
    %c0_0 = arith.constant 0 : index
    %0 = vector.load %arg1[%c0, %c0_0] : memref<16x32xf32, #tpu.memory_space<vmem>>, vector<16x32xf32>
    %1 = arith.mulf %0, %0 : vector<16x32xf32>
    %cst = arith.constant dense<0.000000e+00> : vector<16xf32>
    %2 = vector.multi_reduction <add>, %1, %cst [1] : vector<16x32xf32> to vector<16xf32>
    %3 = vector.shape_cast %2 : vector<16xf32> to vector<16x1xf32>
    %cst_1 = arith.constant 3.200000e+01 : f32
    %4 = vector.broadcast %cst_1 : f32 to vector<16x1xf32>
    %5 = arith.divf %3, %4 : vector<16x1xf32>
    %cst_2 = arith.constant 9.99999997E-7 : f32
    %6 = vector.broadcast %cst_2 : f32 to vector<16x1xf32>
    %7 = arith.addf %5, %6 : vector<16x1xf32>
    %8 = math.rsqrt %7 : vector<16x1xf32>
    %9 = vector.broadcast %8 : vector<16x1xf32> to vector<16x32xf32>
    %10 = arith.mulf %0, %9 : vector<16x32xf32>
    %11 = arith.truncf %10 : vector<16x32xf32> to vector<16x32xbf16>
    %c0_3 = arith.constant 0 : index
    %c0_4 = arith.constant 0 : index
    %12 = vector.load %arg2[%c0_3, %c0_4] : memref<32x256xbf16, #tpu.memory_space<vmem>>, vector<32x256xbf16>
    %cst_5 = arith.constant dense<0.000000e+00> : vector<16x256xf32>
    %13 = tpu.matmul %11, %12, %cst_5 {dimension_numbers = #tpu.dot_dimension_numbers<[1], [0], [0], [1], [0, 0, 1, 1], [], []>} : vector<16x32xbf16>, vector<32x256xbf16>, vector<16x256xf32> -> vector<16x256xf32>
    %c0_6 = arith.constant 0 : index
    %c0_7 = arith.constant 0 : index
    %14 = vector.load %arg3[%c0_6, %c0_7] : memref<16x256xf32, #tpu.memory_space<vmem>>, vector<16x256xf32>
    tpu.vector_store %arg3[%c0_6, %c0_7], %13 {strides = array<i32>} : memref<16x256xf32, #tpu.memory_space<vmem>>, vector<16x256xf32>,
    return
  }
  func.func @transform_0(%arg0: i32) -> (i32, i32) {
    %c0_i32 = arith.constant 0 : i32
    %c0_i32_0 = arith.constant 0 : i32
    %c0_i32_1 = arith.constant 0 : i32
    return %c0_i32, %c0_i32_0 : i32, i32
  }
  func.func @transform_1(%arg0: i32) -> (i32, i32) {
    %c0_i32 = arith.constant 0 : i32
    %c0_i32_0 = arith.constant 0 : i32
    return %c0_i32, %arg0 : i32, i32
  }
  func.func @transform_2(%arg0: i32) -> (i32, i32) {
    %c0_i32 = arith.constant 0 : i32
    %c0_i32_0 = arith.constant 0 : i32
    return %c0_i32, %arg0 : i32, i32
  }
}

</mosaic_0001>

<llo_original>
// kernel: tpu_custom_call.1
$region0: #{tpu_custom_call.1}
  #allocation0 [shape = 'u32[]', space=smem, size = 0x4, offset = 0x4, fixed_abs, tag = 'smem constant byte address 0x4 - core index']
  #allocation1 [shape = 'u32[144,128]{1,0:T(1,128)}', space=vmem, size = 0x12000, scoped, tag = 'internal scratch']
  %s0 = inlined_call_operand.hbm [shape: f32[16,32], index: 0, kind: input, shape index: {}]
  %s1 = inlined_call_operand.hbm [shape: bf16[32,256], index: 1, kind: input, shape index: {}]
  %s2 = inlined_call_operand.hbm [shape: f32[16,256], index: 2, kind: output, shape index: {}]
  %s3 = sld [smem:[#allocation0]]
  $region26: #{tpu_custom_call.1} parent=0
    _
  %s5 = ssub.s32 1, %s3
  %s6 = scalar_select 0, %s5, %s3
  $region1: #{tpu_custom_call.1} parent=0
    #allocation2 [shape = 'u8[8192]{0}', space=vmem, size = 0x2000, scoped, tag = 'input window, operand 0, single buffered']
    #allocation3 [shape = 's32[1]{0}', space=sflag, size = 0x4, scoped, tag = 'scoped memory for tpu_custom_call.1']
    #allocation4 [shape = 's32[1]{0}', space=sflag, size = 0x4, scoped, tag = 'scoped memory for tpu_custom_call.1']
    #allocation5 [shape = 'u8[16384]{0}', space=vmem, size = 0x4000, scoped, tag = 'input window, operand 1, single buffered']
    #allocation6 [shape = 's32[1]{0}', space=sflag, size = 0x4, scoped, tag = 'scoped memory for tpu_custom_call.1']
    #allocation7 [shape = 'u8[16384]{0}', space=vmem, size = 0x4000, scoped, tag = 'output window, operand 0, single buffered']
    %7 = vsyncpa [#allocation3], 0
    %8 = vsyncpa [#allocation6], 0
    %9 = vsyncpa [#allocation4], 0
    // Predicated region
    $region2: #{tpu_custom_call.1} parent=1 // pred_check
      _
    $region3: #{tpu_custom_call.1} parent=1 // pred_check_branch
      %11 = sbr.rel (0) target = $region5
    $region4: #{tpu_custom_call.1} parent=1 // pred_region
      %s13 = ssub.s32 256, 256
      %14 = vsyncadd [#allocation3], %s13
      %s15 = sshll.u32 [#allocation2], 4
      %s16 = int_to_ptr.vmem [resolvable:$true] %s15
      %21 = dma.hbm_to_vmem [thread:$0]  %s0, 256, %s16, [#allocation3], 128, 128, 8
    $region5: #{tpu_custom_call.1} parent=1 // pred_fallthru
      _
    // Predicated region
    $region6: #{tpu_custom_call.1} parent=1 // pred_check
      _
    $region7: #{tpu_custom_call.1} parent=1 // pred_check_branch
      %23 = sbr.rel (0) target = $region9
    $region8: #{tpu_custom_call.1} parent=1 // pred_region
      %s25 = ssub.s32 512, 512
      %26 = vsyncadd [#allocation6], %s25
      %s27 = sshll.u32 [#allocation5], 4
      %s28 = int_to_ptr.vmem [resolvable:$true] %s27
      %33 = dma.hbm_to_vmem [thread:$0]  %s1, 512, %s28, [#allocation6], 128, 128, 8
    $region9: #{tpu_custom_call.1} parent=1 // pred_fallthru
      _
    // Predicated region
    $region10: #{tpu_custom_call.1} parent=1 // pred_check
      _
    $region11: #{tpu_custom_call.1} parent=1 // pred_check_branch
      %35 = sbr.rel (0) target = $region13
    $region12: #{tpu_custom_call.1} parent=1 // pred_region
      %36 = dma.done [#allocation3], 256
    $region13: #{tpu_custom_call.1} parent=1 // pred_fallthru
      _
    // Predicated region
    $region14: #{tpu_custom_call.1} parent=1 // pred_check
      _
    $region15: #{tpu_custom_call.1} parent=1 // pred_check_branch
      %38 = sbr.rel (0) target = $region17
    $region16: #{tpu_custom_call.1} parent=1 // pred_region
      %39 = dma.done [#allocation6], 512
    $region17: #{tpu_custom_call.1} parent=1 // pred_fallthru
      _
    %v41 = vld [vmem:[#allocation2] sm:$0xff]
    %v42 = vld [vmem:[#allocation2 + $0x8] sm:$0xff]
    %v43 = vmul.f32 %v41, %v41
    %v44 = vmul.f32 %v42, %v42
    %vm45 = vcmask 261120
    %v46 = vsel %vm45, %v43, 0.0
    %47 = vadd.xlane.f32.xlu0 %v46
    %v48 = vpop.xlane.xlu0 %47
    %v49 = vsel %vm45, %v44, 0.0
    %50 = vadd.xlane.f32.xlu0 %v49
    %v51 = vpop.xlane.xlu0 %50
    %v52 = vrcp.pop 32.0
    %v53 = vmul.f32 %v48, %v52
    %v54 = vmul.f32 %v51, %v52
    %v55 = vadd.f32 %v53, 1e-06
    %v56 = vadd.f32 %v54, 1e-06
    %v57 = vrsqrt.pop %v55
    %v58 = vrsqrt.pop %v56
    %v59 = vmul.f32 %v41, %v57
    %v60 = vmul.f32 %v42, %v58
    %v61 = vpack.c.bf16 %v60, %v59
    %v62 = vld [vmem:[#allocation5] sm:$0xff]
    %v63 = vld [vmem:[#allocation5 + $0x8] sm:$0xff]
    %v64 = vld [vmem:[#allocation5 + $0x10] sm:$0xff]
    %v65 = vld [vmem:[#allocation5 + $0x18] sm:$0xff]
    %v70 = vunpack.c.l.b16 %v62
    %v71 = vunpack.c.h.b16 %v62
    %v72 = vunpack.c.l.b16 %v63
    %v73 = vunpack.c.h.b16 %v63
    %v74 = vunpack.c.l.b16 %v64
    %v75 = vunpack.c.h.b16 %v64
    %v76 = vunpack.c.l.b16 %v65
    %v77 = vunpack.c.h.b16 %v65
    %v78 = vpack.c.b16 %v72, %v70
    %v79 = vpack.c.b16 %v73, %v71
    %v80 = vpack.c.b16 %v76, %v74
    %v81 = vpack.c.b16 %v77, %v75
    %v87 = vsel %vm45, %v61, 0
    %89 = vmatprep.subr.bf16.mxu0 0
    %90 = vmatpush1.bf16.msra.mxu0 0
    %91 = vmatprep.subr.bf16.mxu0 0
    %92 = vmatpush1.bf16.msra.mxu0 0
    %93 = vmatprep.subr.bf16.mxu0 0
    %94 = vmatpush1.bf16.msra.mxu0 0
    %95 = vmatprep.subr.bf16.mxu0 0
    %96 = vmatpush1.bf16.msra.mxu0 0
    %97 = vmatprep.subr.bf16.mxu0 0
    %98 = vmatpush1.bf16.msra.mxu0 0
    %99 = vmatprep.subr.bf16.mxu0 0
    %100 = vmatpush1.bf16.msra.mxu0 0
    %101 = vmatprep.subr.bf16.mxu0 %v81
    %102 = vmatpush1.bf16.msra.mxu0 %v80
    %103 = vmatprep.subr.bf16.mxu0 %v79
    %104 = vmatpush1.bf16.msra.mxu0 %v78
    %105 = vmatprep.subr.bf16.mxu0 0
    %106 = vmatpush2.bf16.msra.mxu0 0
    %107 = vmatprep.subr.bf16.mxu0 0
    %108 = vmatpush2.bf16.msra.mxu0 0
    %109 = vmatprep.subr.bf16.mxu0 0
    %110 = vmatpush2.bf16.msra.mxu0 0
    %111 = vmatprep.subr.bf16.mxu0 0
    %112 = vmatpush2.bf16.msra.mxu0 0
    %113 = vmatprep.subr.bf16.mxu0 0
    %114 = vmatpush2.bf16.msra.mxu0 0
    %115 = vmatprep.subr.bf16.mxu0 0
    %116 = vmatpush2.bf16.msra.mxu0 0
    %117 = vmatprep.subr.bf16.mxu0 0
    %118 = vmatpush2.bf16.msra.mxu0 0
    %119 = vmatprep.subr.bf16.mxu0 0
    %120 = vmatpush2.bf16.msra.mxu0 0
    %121 = vmatprep.mubr.bf16.mxu0 0
    %122 = vmatmul.mubr.bf16.gmra.mxu0 %v87
    %v123 = vpop.f32.mrf.mxu0
    %v124 = vadd.f32 0.0, %v123
    %v125 = vpop.f32.mrf.mxu0
    %v126 = vadd.f32 0.0, %v125
    %v127 = vpop.f32.mrf.mxu0
    %v128 = vadd.f32 0.0, %v127
    %v129 = vpop.f32.mrf.mxu0
    %v130 = vadd.f32 0.0, %v129
    %131 = vdwg.mxu0
    %132 = vst [vmem:[#allocation7] sm:$0xff] %v124
    %133 = vst [vmem:[#allocation7 + $0x8] sm:$0xff] %v126
    %134 = vst [vmem:[#allocation7 + $0x10] sm:$0xff] %v128
    %135 = vst [vmem:[#allocation7 + $0x18] sm:$0xff] %v130
    // Predicated region
    $region18: #{tpu_custom_call.1} parent=1 // pred_check
      _
    $region19: #{tpu_custom_call.1} parent=1 // pred_check_branch
      %137 = sbr.rel (0) target = $region21
    $region20: #{tpu_custom_call.1} parent=1 // pred_region
      %s139 = ssub.s32 512, 512
      %140 = vsyncadd [#allocation4], %s139
      %s141 = sshll.u32 [#allocation7], 4
      %s142 = int_to_ptr.vmem [resolvable:$true] %s141
      %147 = dma.vmem_to_hbm [thread:$0]  %s142, 512, %s2, [#allocation4], 256, 256, 16
    $region21: #{tpu_custom_call.1} parent=1 // pred_fallthru
      _
    // Predicated region
    $region22: #{tpu_custom_call.1} parent=1 // pred_check
      _
    $region23: #{tpu_custom_call.1} parent=1 // pred_check_branch
      %149 = sbr.rel (0) target = $region25
    $region24: #{tpu_custom_call.1} parent=1 // pred_region
      %150 = dma.done [#allocation4], 512
    $region25: #{tpu_custom_call.1} parent=1 // pred_fallthru
      _
    %151 = vsyncpa [#allocation3], 1
    %152 = vsyncpa [#allocation6], 1
    %153 = vsyncpa [#allocation4], 1

</llo_original>
